<compile_context>
chip_gen: v5e
topology: v5e:2x2
jax: 0.10.0
libtpu: 0.0.40
codegen_flags: <defaults>
</compile_context>

<pallas_src>
import functools

import jax
import jax.numpy as jnp
from jax.experimental import pallas as pl
from jax.experimental.pallas import tpu as pltpu

LN_EPS = 1e-5  # PyTorch F.layer_norm default eps


def residual_block_kernel(x_ref, w1_ref, b1_ref, w2_ref, b2_ref, o_ref):
    E = x_ref.shape[-1]
    O = o_ref.shape[-1]

    # Single tile load; derive both consumers from it.
    xv = x_ref[...]
    x_f32 = xv.astype(jnp.float32)        # residual branch stays exact f32
    x_mm = xv.astype(w1_ref.dtype)        # matmul operand (bf16)

    # linear1 + ReLU  (MXU matmul, f32 accumulation)
    h = jnp.dot(x_mm, w1_ref[...], preferred_element_type=jnp.float32)
    h = jnp.maximum(h + b1_ref[...], 0.0)

    # linear2 (cast activations to the weight dtype for the MXU)
    z = jnp.dot(h.astype(w2_ref.dtype), w2_ref[...],
                preferred_element_type=jnp.float32)
    z = z + b2_ref[...]

    # layer_norm over the last dim (no affine), two-pass statistics
    mean = jnp.mean(z, axis=-1, keepdims=True)
    zc = z - mean
    var = jnp.mean(zc * zc, axis=-1, keepdims=True)
    zn = zc * jax.lax.rsqrt(var + LN_EPS)

    # Residual = x zero-padded to O lanes (F.pad(x, (0, O - E))), built
    # in-register so the kernel issues exactly ONE full-width store.
    if O > E:
        pad = jnp.zeros((x_f32.shape[0], O - E), dtype=jnp.float32)
        res = jnp.concatenate([x_f32, pad], axis=-1)
    else:
        res = x_f32
    o_ref[...] = (zn + res).astype(o_ref.dtype)


def _round_up(n, m):
    return ((n + m - 1) // m) * m


@functools.partial(jax.jit,
                   static_argnames=("out_dim", "tb", "matmul_dtype",
                                    "num_cores"))
def residual_block(x, w1, b1, w2, b2, *, out_dim, tb=512,
                   matmul_dtype=jnp.bfloat16, num_cores=2):
    B, E = x.shape
    H = w1.shape[1]
    O = out_dim
    # The module's residual add requires out_dim >= emb_dim (else it would
    # shape-error in PyTorch too).
    assert O >= E, "out_dim must be >= emb_dim for the residual add"
    assert w1.shape == (E, H) and w2.shape == (H, O)
    assert b1.shape == (H,) and b2.shape == (O,)

    # Halve weight HBM traffic; matmuls run bf16 on the MXU with f32 accum.
    w1c = w1.astype(matmul_dtype)
    w2c = w2.astype(matmul_dtype)
    b1_2d = b1.reshape(1, H).astype(jnp.float32)
    b2_2d = b2.reshape(1, O).astype(jnp.float32)

    # Sublane tile of the I/O dtype: 8 rows for 4-byte, 16 for 2-byte, 32 for
    # 1-byte elements (bf16 packs 16 sublanes per vreg).
    itemsize = jnp.dtype(x.dtype).itemsize
    sub = max(8, 32 // max(1, itemsize))

    # Batch tile: multiple of the sublane tile, no larger than the (rounded
    # up) batch or the `tb` cap, and small enough that the grid has at least
    # `num_cores` steps when the batch allows it (keeps both v7x TensorCores
    # busy; on 1-TC chips an extra grid step only costs ~0.35 us).
    tb_cap = min(tb, _round_up(B, sub))
    per_core = _round_up(pl.cdiv(B, num_cores), sub)
    tb_eff = max(sub, min(tb_cap, per_core))
    grid = (pl.cdiv(B, tb_eff),)
    # NOTE: ragged batches (B % tb_eff != 0) rely on Pallas boundary masking;
    # LayerNorm is per-row so padded garbage rows never touch valid output.

    # Explicit VMEM budget (bytes): double-buffered x/out tiles, resident
    # (double-buffered) weights + biases, and the f32 intermediates
    # (h: tb x H, z/zn/residual: ~4 x tb x O).  Clamp to v7x's 64 MiB.
    w_bytes = jnp.dtype(matmul_dtype).itemsize
    io_bytes = 2 * tb_eff * E * itemsize + 2 * tb_eff * O * itemsize
    weight_bytes = 2 * ((E * H + H * O) * w_bytes + (H + O) * 4)
    interm_bytes = tb_eff * H * 4 + 4 * tb_eff * O * 4
    budget = io_bytes + weight_bytes + interm_bytes
    vmem_limit = min(64 * 1024 * 1024,
                     max(32 * 1024 * 1024, int(1.5 * budget)))

    return pl.pallas_call(
        residual_block_kernel,
        out_shape=jax.ShapeDtypeStruct((B, O), x.dtype),
        grid_spec=pltpu.PrefetchScalarGridSpec(
            num_scalar_prefetch=0,
            grid=grid,
            in_specs=[
                pl.BlockSpec((tb_eff, E), lambda i: (i, 0)),  # x tile
                pl.BlockSpec((E, H), lambda i: (0, 0)),       # W1 (resident)
                pl.BlockSpec((1, H), lambda i: (0, 0)),       # b1
                pl.BlockSpec((H, O), lambda i: (0, 0)),       # W2 (resident)
                pl.BlockSpec((1, O), lambda i: (0, 0)),       # b2
            ],
            out_specs=pl.BlockSpec((tb_eff, O), lambda i: (i, 0)),
        ),
        compiler_params=pltpu.CompilerParams(
            dimension_semantics=("parallel",),
            vmem_limit_bytes=vmem_limit,
        ),
    )(x, w1c, b1_2d, w2c, b2_2d)


def _reference(x, w1, b1, w2, b2, out_dim, matmul_dtype=jnp.bfloat16):
    # Pure-JAX reference with the SAME matmul precision as the kernel
    # (bf16 operands, f32 accumulation); LN / residual in f32.
    h = jnp.dot(x.astype(matmul_dtype), w1.astype(matmul_dtype),
                preferred_element_type=jnp.float32) + b1
    h = jnp.maximum(h, 0.0)
    z = jnp.dot(h.astype(matmul_dtype), w2.astype(matmul_dtype),
                preferred_element_type=jnp.float32) + b2
    mean = jnp.mean(z, axis=-1, keepdims=True)
    var = jnp.mean((z - mean) ** 2, axis=-1, keepdims=True)
    zn = (z - mean) / jnp.sqrt(var + LN_EPS)
    B, E = x.shape
    if out_dim > E:
        x = jnp.pad(x, ((0, 0), (0, out_dim - E)))
    return zn + x


if __name__ == "__main__":
    # Small shapes implied by the module: x is (batch, emb_dim).
    batch, emb_dim, out_dim = 8, 32, 64
    hidden = emb_dim * 4  # 128

    key = jax.random.PRNGKey(0)
    kx, k1, k2, k3, k4 = jax.random.split(key, 5)

    x = jax.random.normal(kx, (batch, emb_dim), dtype=jnp.float32)
    # Parameters stored transposed as (in, out) relative to nn.Linear.weight.
    w1 = jax.random.normal(k1, (emb_dim, hidden), dtype=jnp.float32) * (1.0 / emb_dim**0.5)
    b1 = jax.random.normal(k2, (hidden,), dtype=jnp.float32) * 0.01
    w2 = jax.random.normal(k3, (hidden, out_dim), dtype=jnp.float32) * (1.0 / hidden**0.5)
    b2 = jax.random.normal(k4, (out_dim,), dtype=jnp.float32) * 0.01

    out = residual_block(x, w1, b1, w2, b2, out_dim=out_dim)
    out = jax.block_until_ready(out)

    ref = _reference(x, w1, b1, w2, b2, out_dim)
    assert out.shape == (batch, out_dim)
    assert jnp.allclose(out, ref, atol=2e-3, rtol=2e-3), "mismatch vs reference"

    print("KERNEL_OK")
</pallas_src>

<mosaic_0001>
module attributes {stable_mosaic.version = 11 : i64} {
  func.func @residual_block_kernel(%arg0: i32, %arg1: memref<8x32xf32, #tpu.memory_space<vmem>>, %arg2: memref<32x128xbf16, #tpu.memory_space<vmem>>, %arg3: memref<1x128xf32, #tpu.memory_space<vmem>>, %arg4: memref<128x64xbf16, #tpu.memory_space<vmem>>, %arg5: memref<1x64xf32, #tpu.memory_space<vmem>>, %arg6: memref<8x64xf32, #tpu.memory_space<vmem>>) attributes {dimension_semantics = [#tpu.dimension_semantics<parallel>], iteration_bounds = array<i64: 1>, scalar_prefetch = 0 : i64, scratch_operands = 0 : i64, tpu.core_type = #tpu.core_type<tc>, window_params = [{transform_indices = @transform_0, window_bounds = array<i64: 8, 32>}, {pipeline_mode = #tpu.pipeline_mode<synchronous>, transform_indices = @transform_1, window_bounds = array<i64: 32, 128>}, {pipeline_mode = #tpu.pipeline_mode<synchronous>, transform_indices = @transform_2, window_bounds = array<i64: 1, 128>}, {pipeline_mode = #tpu.pipeline_mode<synchronous>, transform_indices = @transform_3, window_bounds = array<i64: 128, 64>}, {pipeline_mode = #tpu.pipeline_mode<synchronous>, transform_indices = @transform_4, window_bounds = array<i64: 1, 64>}, {transform_indices = @transform_5, window_bounds = array<i64: 8, 64>}]} {
    %c0 = arith.constant 0 : index
    %c0_0 = arith.constant 0 : index
    %0 = vector.load %arg1[%c0, %c0_0] : memref<8x32xf32, #tpu.memory_space<vmem>>, vector<8x32xf32>
    %1 = arith.truncf %0 : vector<8x32xf32> to vector<8x32xbf16>
    %c0_1 = arith.constant 0 : index
    %c0_2 = arith.constant 0 : index
    %2 = vector.load %arg2[%c0_1, %c0_2] : memref<32x128xbf16, #tpu.memory_space<vmem>>, vector<32x128xbf16>
    %cst = arith.constant dense<0.000000e+00> : vector<8x128xf32>
    %3 = tpu.matmul %1, %2, %cst {dimension_numbers = #tpu.dot_dimension_numbers<[1], [0], [0], [1], [0, 0, 1, 1], [], []>} : vector<8x32xbf16>, vector<32x128xbf16>, vector<8x128xf32> -> vector<8x128xf32>
    %c0_3 = arith.constant 0 : index
    %c0_4 = arith.constant 0 : index
    %4 = vector.load %arg3[%c0_3, %c0_4] : memref<1x128xf32, #tpu.memory_space<vmem>>, vector<1x128xf32>
    %5 = vector.broadcast %4 : vector<1x128xf32> to vector<8x128xf32>
    %6 = arith.addf %3, %5 : vector<8x128xf32>
    %cst_5 = arith.constant 0.000000e+00 : f32
    %7 = vector.broadcast %cst_5 : f32 to vector<8x128xf32>
    %8 = arith.maximumf %6, %7 : vector<8x128xf32>
    %9 = arith.truncf %8 : vector<8x128xf32> to vector<8x128xbf16>
    %c0_6 = arith.constant 0 : index
    %c0_7 = arith.constant 0 : index
    %10 = vector.load %arg4[%c0_6, %c0_7] : memref<128x64xbf16, #tpu.memory_space<vmem>>, vector<128x64xbf16>
    %cst_8 = arith.constant dense<0.000000e+00> : vector<8x64xf32>
    %11 = tpu.matmul %9, %10, %cst_8 {dimension_numbers = #tpu.dot_dimension_numbers<[1], [0], [0], [1], [0, 0, 1, 1], [], []>} : vector<8x128xbf16>, vector<128x64xbf16>, vector<8x64xf32> -> vector<8x64xf32>
    %c0_9 = arith.constant 0 : index
    %c0_10 = arith.constant 0 : index
    %12 = vector.load %arg5[%c0_9, %c0_10] : memref<1x64xf32, #tpu.memory_space<vmem>>, vector<1x64xf32>
    %13 = vector.broadcast %12 : vector<1x64xf32> to vector<8x64xf32>
    %14 = arith.addf %11, %13 : vector<8x64xf32>
    %cst_11 = arith.constant dense<0.000000e+00> : vector<8xf32>
    %15 = vector.multi_reduction <add>, %14, %cst_11 [1] : vector<8x64xf32> to vector<8xf32>
    %16 = vector.shape_cast %15 : vector<8xf32> to vector<8x1xf32>
    %cst_12 = arith.constant 6.400000e+01 : f32
    %17 = vector.broadcast %cst_12 : f32 to vector<8x1xf32>
    %18 = arith.divf %16, %17 : vector<8x1xf32>
    %19 = vector.broadcast %18 : vector<8x1xf32> to vector<8x64xf32>
    %20 = arith.subf %14, %19 : vector<8x64xf32>
    %21 = arith.mulf %20, %20 : vector<8x64xf32>
    %cst_13 = arith.constant dense<0.000000e+00> : vector<8xf32>
    %22 = vector.multi_reduction <add>, %21, %cst_13 [1] : vector<8x64xf32> to vector<8xf32>
    %23 = vector.shape_cast %22 : vector<8xf32> to vector<8x1xf32>
    %cst_14 = arith.constant 6.400000e+01 : f32
    %24 = vector.broadcast %cst_14 : f32 to vector<8x1xf32>
    %25 = arith.divf %23, %24 : vector<8x1xf32>
    %cst_15 = arith.constant 9.99999974E-6 : f32
    %26 = vector.broadcast %cst_15 : f32 to vector<8x1xf32>
    %27 = arith.addf %25, %26 : vector<8x1xf32>
    %28 = math.rsqrt %27 : vector<8x1xf32>
    %29 = vector.broadcast %28 : vector<8x1xf32> to vector<8x64xf32>
    %30 = arith.mulf %20, %29 : vector<8x64xf32>
    %cst_16 = arith.constant 0.000000e+00 : f32
    %31 = vector.broadcast %cst_16 : f32 to vector<8x32xf32>
    %32 = tpu.concatenate %0, %31 in 1 : vector<8x32xf32>, vector<8x32xf32> -> vector<8x64xf32>
    %33 = arith.addf %30, %32 : vector<8x64xf32>
    %c0_17 = arith.constant 0 : index
    %c0_18 = arith.constant 0 : index
    %34 = vector.load %arg6[%c0_17, %c0_18] : memref<8x64xf32, #tpu.memory_space<vmem>>, vector<8x64xf32>
    tpu.vector_store %arg6[%c0_17, %c0_18], %33 {strides = array<i32>} : memref<8x64xf32, #tpu.memory_space<vmem>>, vector<8x64xf32>,
    return
  }
  func.func @transform_0(%arg0: i32) -> (i32, i32) {
    %c0_i32 = arith.constant 0 : i32
    %c0_i32_0 = arith.constant 0 : i32
    return %arg0, %c0_i32 : i32, i32
  }
  func.func @transform_1(%arg0: i32) -> (i32, i32) {
    %c0_i32 = arith.constant 0 : i32
    %c0_i32_0 = arith.constant 0 : i32
    %c0_i32_1 = arith.constant 0 : i32
    return %c0_i32, %c0_i32_0 : i32, i32
  }
  func.func @transform_2(%arg0: i32) -> (i32, i32) {
    %c0_i32 = arith.constant 0 : i32
    %c0_i32_0 = arith.constant 0 : i32
    %c0_i32_1 = arith.constant 0 : i32
    return %c0_i32, %c0_i32_0 : i32, i32
  }
  func.func @transform_3(%arg0: i32) -> (i32, i32) {
    %c0_i32 = arith.constant 0 : i32
    %c0_i32_0 = arith.constant 0 : i32
    %c0_i32_1 = arith.constant 0 : i32
    return %c0_i32, %c0_i32_0 : i32, i32
  }
  func.func @transform_4(%arg0: i32) -> (i32, i32) {
    %c0_i32 = arith.constant 0 : i32
    %c0_i32_0 = arith.constant 0 : i32
    %c0_i32_1 = arith.constant 0 : i32
    return %c0_i32, %c0_i32_0 : i32, i32
  }
  func.func @transform_5(%arg0: i32) -> (i32, i32) {
    %c0_i32 = arith.constant 0 : i32
    %c0_i32_0 = arith.constant 0 : i32
    return %arg0, %c0_i32 : i32, i32
  }
}

</mosaic_0001>

<llo_original>
// kernel: residual_block.1
$region0: #{residual_block.1}
  #allocation0 [shape = 'u32[]', space=smem, size = 0x4, offset = 0x4, fixed_abs, tag = 'smem constant byte address 0x4 - core index']
  #allocation1 [shape = 'u32[72,128]{1,0:T(1,128)}', space=vmem, size = 0x9000, scoped, tag = 'internal scratch']
  %s0 = inlined_call_operand.vmem [shape: f32[8,32], index: 0, kind: input, shape index: {}]
  %s1 = inlined_call_operand.vmem [shape: bf16[32,128], index: 1, kind: input, shape index: {}]
  %s2 = inlined_call_operand.vmem [shape: f32[1,128], index: 2, kind: input, shape index: {}]
  %s3 = inlined_call_operand.vmem [shape: bf16[128,64], index: 3, kind: input, shape index: {}]
  %s4 = inlined_call_operand.vmem [shape: f32[1,64], index: 4, kind: input, shape index: {}]
  %s5 = inlined_call_operand.hbm [shape: f32[8,64], index: 5, kind: output, shape index: {}]
  %s6 = sld [smem:[#allocation0]]
  $region30: #{residual_block.1} parent=0
    _
  %s8 = ssub.s32 1, %s6
  %s9 = scalar_select 0, %s8, %s6
  $region1: #{residual_block.1} parent=0
    #allocation2 [shape = 'u8[4096]{0}', space=vmem, size = 0x1000, scoped, tag = 'output window, operand 0, single buffered']
    #allocation3 [shape = 's32[1]{0}', space=sflag, size = 0x4, scoped, tag = 'scoped memory for residual_block.1']
    %10 = vsyncpa [#allocation3], 0
    // Predicated region
    $region2: #{residual_block.1} parent=1 // pred_check
      _
    $region3: #{residual_block.1} parent=1 // pred_check_branch
      %12 = sbr.rel (0) target = $region5
    $region4: #{residual_block.1} parent=1 // pred_region
      _
    $region5: #{residual_block.1} parent=1 // pred_fallthru
      _
    // Predicated region
    $region6: #{residual_block.1} parent=1 // pred_check
      _
    $region7: #{residual_block.1} parent=1 // pred_check_branch
      %14 = sbr.rel (0) target = $region9
    $region8: #{residual_block.1} parent=1 // pred_region
      _
    $region9: #{residual_block.1} parent=1 // pred_fallthru
      _
    // Predicated region
    $region10: #{residual_block.1} parent=1 // pred_check
      _
    $region11: #{residual_block.1} parent=1 // pred_check_branch
      %16 = sbr.rel (0) target = $region13
    $region12: #{residual_block.1} parent=1 // pred_region
      _
    $region13: #{residual_block.1} parent=1 // pred_fallthru
      _
    // Predicated region
    $region14: #{residual_block.1} parent=1 // pred_check
      _
    $region15: #{residual_block.1} parent=1 // pred_check_branch
      %18 = sbr.rel (0) target = $region17
    $region16: #{residual_block.1} parent=1 // pred_region
      _
    $region17: #{residual_block.1} parent=1 // pred_fallthru
      _
    // Predicated region
    $region18: #{residual_block.1} parent=1 // pred_check
      _
    $region19: #{residual_block.1} parent=1 // pred_check_branch
      %20 = sbr.rel (0) target = $region21
    $region20: #{residual_block.1} parent=1 // pred_region
      _
    $region21: #{residual_block.1} parent=1 // pred_fallthru
      _
    %v22 = vld [vmem:[%s0] sm:$0xff]
    %v23 = vpack.c.bf16 %v22, %v22
    %v24 = vld [vmem:[%s1] sm:$0xf]
    %v25 = vld [vmem:[%s1 + $0x4] sm:$0xf]
    %v26 = vld [vmem:[%s1 + $0x8] sm:$0xf]
    %v27 = vld [vmem:[%s1 + $0xc] sm:$0xf]
    %v28 = vld [vmem:[%s2] sm:$0x1]
    %v30 = vperm.slane %v28, 0
    %v36 = vunpack.c.l.b16 %v24
    %v37 = vunpack.c.l.b16 %v25
    %v38 = vunpack.c.l.b16 %v26
    %v39 = vunpack.c.l.b16 %v27
    %v40 = vpack.c.b16 %v37, %v36
    %v41 = vpack.c.b16 %v39, %v38
    %vm44 = vcmask 261120
    %v46 = vsel %vm44, %v23, 0
    %48 = vmatpush.bf16.msra.mxu0 0
    %49 = vmatpush.bf16.msra.mxu0 0
    %50 = vmatpush.bf16.msra.mxu0 0
    %51 = vmatpush.bf16.msra.mxu0 0
    %52 = vmatpush.bf16.msra.mxu0 0
    %53 = vmatpush.bf16.msra.mxu0 0
    %54 = vmatpush.bf16.msra.mxu0 %v41
    %55 = vmatpush.bf16.msra.mxu0 %v40
    %56 = vmatmul.bf16.gmra.mxu0 %v46
    %v57 = vpop.f32.mrf.mxu0
    %v58 = vadd.f32 %v30, %v57
    %v59 = vpop.f32.mrf.mxu0
    %60 = vdwg.mxu0
    %v61 = vmax.f32 %v58, 0.0
    %v62 = vpack.c.bf16 %v61, %v61
    %v63 = vld [vmem:[%s3] sm:$0xf]
    %v64 = vld [vmem:[%s3 + $0x4] sm:$0xf]
    %v65 = vld [vmem:[%s3 + $0x8] sm:$0xf]
    %v66 = vld [vmem:[%s3 + $0xc] sm:$0xf]
    %v67 = vld [vmem:[%s3 + $0x10] sm:$0xf]
    %v68 = vld [vmem:[%s3 + $0x14] sm:$0xf]
    %v69 = vld [vmem:[%s3 + $0x18] sm:$0xf]
    %v70 = vld [vmem:[%s3 + $0x1c] sm:$0xf]
    %v71 = vld [vmem:[%s3 + $0x20] sm:$0xf]
    %v72 = vld [vmem:[%s3 + $0x24] sm:$0xf]
    %v73 = vld [vmem:[%s3 + $0x28] sm:$0xf]
    %v74 = vld [vmem:[%s3 + $0x2c] sm:$0xf]
    %v75 = vld [vmem:[%s3 + $0x30] sm:$0xf]
    %v76 = vld [vmem:[%s3 + $0x34] sm:$0xf]
    %v77 = vld [vmem:[%s3 + $0x38] sm:$0xf]
    %v78 = vld [vmem:[%s3 + $0x3c] sm:$0xf]
    %v79 = vld [vmem:[%s4] sm:$0x1]
    %v81 = vperm.slane %v79, 0
    %v99 = vunpack.c.l.b16 %v63
    %v100 = vunpack.c.l.b16 %v64
    %v101 = vunpack.c.l.b16 %v65
    %v102 = vunpack.c.l.b16 %v66
    %v103 = vunpack.c.l.b16 %v67
    %v104 = vunpack.c.l.b16 %v68
    %v105 = vunpack.c.l.b16 %v69
    %v106 = vunpack.c.l.b16 %v70
    %v107 = vunpack.c.l.b16 %v71
    %v108 = vunpack.c.l.b16 %v72
    %v109 = vunpack.c.l.b16 %v73
    %v110 = vunpack.c.l.b16 %v74
    %v111 = vunpack.c.l.b16 %v75
    %v112 = vunpack.c.l.b16 %v76
    %v113 = vunpack.c.l.b16 %v77
    %v114 = vunpack.c.l.b16 %v78
    %v115 = vpack.c.b16 %v100, %v99
    %v116 = vpack.c.b16 %v102, %v101
    %v117 = vpack.c.b16 %v104, %v103
    %v118 = vpack.c.b16 %v106, %v105
    %v119 = vpack.c.b16 %v108, %v107
    %v120 = vpack.c.b16 %v110, %v109
    %v121 = vpack.c.b16 %v112, %v111
    %v122 = vpack.c.b16 %v114, %v113
    %131 = vmatpush.bf16.msra.mxu0 %v122
    %132 = vmatpush.bf16.msra.mxu0 %v121
    %133 = vmatpush.bf16.msra.mxu0 %v120
    %134 = vmatpush.bf16.msra.mxu0 %v119
    %135 = vmatpush.bf16.msra.mxu0 %v118
    %136 = vmatpush.bf16.msra.mxu0 %v117
    %137 = vmatpush.bf16.msra.mxu0 %v116
    %138 = vmatpush.bf16.msra.mxu0 %v115
    %139 = vmatmul.bf16.gmra.mxu0 %v62
    %v140 = vpop.f32.mrf.mxu0
    %v141 = vadd.f32 %v81, %v140
    %v142 = vpop.f32.mrf.mxu0
    %143 = vdwg.mxu0
    %vm144 = vcmask 523264
    %v145 = vsel %vm144, %v141, 0.0
    %146 = vadd.xlane.f32.xlu0 %v145
    %v147 = vpop.xlane.xlu0 %146
    %v148 = vrcp.pop 64.0
    %v149 = vmul.f32 64.0, %v148
    %v150 = vsub.f32 1.0, %v149
    %v151 = vmul.f32 %v148, %v150
    %v152 = vadd.f32 %v148, %v151
    %vm153 = vweird.f32 %v148
    %v154 = vsel %vm153, %v148, %v152
    %v155 = vmul.f32 %v147, %v154
    %v156 = vsub.f32 %v141, %v155
    %v157 = vmul.f32 %v156, %v156
    %v158 = vsel %vm144, %v157, 0.0
    %159 = vadd.xlane.f32.xlu0 %v158
    %v160 = vpop.xlane.xlu0 %159
    %v161 = vmul.f32 %v160, %v154
    %v162 = vadd.f32 %v161, 1e-05
    %v163 = vrsqrt.pop %v162
    %v164 = vmul.f32 %v163, %v162
    %v165 = vmul.f32 %v164, %v163
    %v166 = vmul.f32 0.5, %v165
    %v167 = vsub.f32 1.5, %v166
    %v168 = vmul.f32 %v163, %v167
    %vm169 = vweird.f32 %v162
    %vm170 = vweird.f32 %v163
    %vm171 = vmor %vm169, %vm170
    %v172 = vsel %vm171, %v163, %v168
    %v173 = vmul.f32 %v156, %v172
    %v174 = vsel %vm44, %v22, 0.0
    %v175 = vadd.f32 %v173, %v174
    %176 = vst.msk [vmem:[#allocation2] sm:$0xff] %vm144, %v175
    // Predicated region
    $region22: #{residual_block.1} parent=1 // pred_check
      _
    $region23: #{residual_block.1} parent=1 // pred_check_branch
      %178 = sbr.rel (0) target = $region25
    $region24: #{residual_block.1} parent=1 // pred_region
      %180 = vsyncadd [#allocation3], 0
      %s182 = sshll.u32 [#allocation2], 4
      %s183 = int_to_ptr.vmem [resolvable:$true] %s182
      %s184 = sshll.u32 %s5, 4
      %s185 = int_to_ptr.hbm [resolvable:$true] %s184
      %187 = dma.vmem_to_hbm [thread:$0]  %s183, 128, %s185, [#allocation3]
    $region25: #{residual_block.1} parent=1 // pred_fallthru
      _
    // Predicated region
    $region26: #{residual_block.1} parent=1 // pred_check
      _
    $region27: #{residual_block.1} parent=1 // pred_check_branch
      %189 = sbr.rel (0) target = $region29
    $region28: #{residual_block.1} parent=1 // pred_region
      %191 = dma.done [#allocation3], 128
    $region29: #{residual_block.1} parent=1 // pred_fallthru
      _
    %192 = vsyncpa [#allocation3], 1

</llo_original>
